<compile_context>
chip_gen: v6e
topology: v6e:2x2x1
jax: 0.10.0
libtpu: 0.0.40
codegen_flags: <defaults>
</compile_context>

<pallas_src>
import jax
import jax.numpy as jnp
from jax.experimental import pallas as pl
from jax.experimental.pallas import tpu as pltpu


_HEAD_PAD = 128          # per-head hidden / output lane width (80,40,A all <=128)
_H1, _H2 = 80, 40        # true hidden widths
_BIAS_ROWS = 8           # bias block padded to 8 rows for sublane alignment


def _round_up(x, m):
    return ((x + m - 1) // m) * m


def _actor_critic_kernel(x_ref, p_ref, out_ref):
    """x_ref: [TB, S] bf16; p_ref: [2*R, 128] bf16 head-stacked params;
    out_ref: [TB, 128] f32 with actor mean in cols 0:A and value at col A."""
    x = x_ref[...]                      # bf16 [TB, S]
    S = x.shape[1]
    R = p_ref.shape[0] // 2
    S_pad = R - (2 * _HEAD_PAD + _BIAS_ROWS)

    acc = None
    for h in range(2):                  # statically unrolled: head 0=actor, 1=critic
        base = h * R
        w1 = p_ref[base:base + S, :]                                   # [S, 128]
        w2 = p_ref[base + S_pad:base + S_pad + _HEAD_PAD, :]           # [128,128]
        w3 = p_ref[base + S_pad + _HEAD_PAD:
                   base + S_pad + 2 * _HEAD_PAD, :]                    # [128,128]
        # One 8x128 bias tile load; rows selected in-register.
        b = p_ref[base + S_pad + 2 * _HEAD_PAD:
                  base + S_pad + 2 * _HEAD_PAD + _BIAS_ROWS, :].astype(jnp.float32)
        b1, b2, b3 = b[0:1, :], b[1:2, :], b[2:3, :]

        h1 = jnp.tanh(jnp.dot(x, w1, preferred_element_type=jnp.float32) + b1)
        h2 = jnp.tanh(jnp.dot(h1.astype(jnp.bfloat16), w2,
                              preferred_element_type=jnp.float32) + b2)
        o = jnp.dot(h2.astype(jnp.bfloat16), w3,
                    preferred_element_type=jnp.float32) + b3
        acc = o if acc is None else acc + o     # heads occupy disjoint output cols

    out_ref[...] = acc.astype(out_ref.dtype)


def pack_params(params, state_size, action_size):
    """Pack the 12 Linear tensors into one head-stacked, lane-dense bf16 slab.

    Per head (R = S_pad + 2*128 + 8 rows, 128 lanes):
      rows [0, S_pad)            W1 (zero-padded cols/rows)
      rows [S_pad, S_pad+128)    W2 (rows 0:80, cols 0:40 nonzero)
      rows [S_pad+128, S_pad+256)W3 (rows 0:40; actor -> cols 0:A, critic -> col A)
      rows [S_pad+256, +8)       bias rows b1, b2, b3 then zero padding
    Slab = concat(actor_block, critic_block) -> [2R, 128].
    """
    S, A = state_size, action_size
    assert A + 1 <= _HEAD_PAD, "action_size + 1 must fit in 128 output lanes"
    S_pad = _round_up(max(S, 8), 8)

    def head_block(w1, b1, w2, b2, w3, b3, out_col, out_w):
        hw1 = jnp.zeros((S_pad, _HEAD_PAD), jnp.float32).at[:S, :_H1].set(w1)
        hw2 = jnp.zeros((_HEAD_PAD, _HEAD_PAD), jnp.float32).at[:_H1, :_H2].set(w2)
        hw3 = jnp.zeros((_HEAD_PAD, _HEAD_PAD), jnp.float32).at[
            :_H2, out_col:out_col + out_w].set(w3)
        hb = jnp.zeros((_BIAS_ROWS, _HEAD_PAD), jnp.float32)
        hb = hb.at[0, :_H1].set(b1[0])
        hb = hb.at[1, :_H2].set(b2[0])
        hb = hb.at[2, out_col:out_col + out_w].set(b3[0])
        return jnp.concatenate([hw1, hw2, hw3, hb], axis=0)

    actor = head_block(params["aw1"], params["ab1"], params["aw2"], params["ab2"],
                       params["aw3"], params["ab3"], out_col=0, out_w=A)
    critic = head_block(params["cw1"], params["cb1"], params["cw2"], params["cb2"],
                        params["cw3"], params["cb3"], out_col=A, out_w=1)
    return jnp.concatenate([actor, critic], axis=0).astype(jnp.bfloat16)


def actor_critic_forward(x, packed, action_size, block_b=256):
    """x: [B, S] f32, packed: output of pack_params.

    Returns (action_mean [B, A], value [B, 1])."""
    B, S = x.shape
    R2, HW = packed.shape

    # Batch tiling: TB rows per grid step (multiple of 8), batch padded to TB.
    TB = min(block_b, _round_up(B, 8))
    B_pad = _round_up(B, TB)
    xp = x.astype(jnp.bfloat16)
    if B_pad != B:
        xp = jnp.pad(xp, ((0, B_pad - B), (0, 0)))
    grid = (B_pad // TB,)

    cost = pl.CostEstimate(
        flops=2 * 2 * B_pad * (S * HW + HW * HW + HW * HW),
        transcendentals=4 * B_pad * HW,
        bytes_accessed=2 * xp.size + 2 * packed.size + 4 * B_pad * HW,
    )

    out = pl.pallas_call(
        _actor_critic_kernel,
        out_shape=jax.ShapeDtypeStruct((B_pad, HW), jnp.float32),
        grid=grid,
        in_specs=[
            pl.BlockSpec((TB, S), lambda i: (i, 0)),      # batch tile of x
            pl.BlockSpec((R2, HW), lambda i: (0, 0)),     # slab: constant block -> resident
        ],
        out_specs=pl.BlockSpec((TB, HW), lambda i: (i, 0)),
        compiler_params=pltpu.CompilerParams(
            dimension_semantics=("parallel",)),           # megacore split on v7x
        cost_estimate=cost,
    )(xp, packed)

    action_mean = out[:B, :action_size]
    value = out[:B, action_size:action_size + 1]
    return action_mean, value


def init_params(key, state_size, action_size):
    """Deterministic synthetic init mirroring the nn.Linear shapes.

    PyTorch nn.Linear(in, out) stores weight as (out, in); we pre-transpose
    to (in, out) so the math is x @ W + b.
    """
    def linear(k, fan_in, fan_out):
        kw, kb = jax.random.split(k)
        bound = 1.0 / jnp.sqrt(jnp.float32(fan_in))
        w = jax.random.uniform(kw, (fan_in, fan_out), jnp.float32, -bound, bound)
        b = jax.random.uniform(kb, (1, fan_out), jnp.float32, -bound, bound)
        return w, b

    keys = jax.random.split(key, 6)
    aw1, ab1 = linear(keys[0], state_size, _H1)
    aw2, ab2 = linear(keys[1], _H1, _H2)
    aw3, ab3 = linear(keys[2], _H2, action_size)
    cw1, cb1 = linear(keys[3], state_size, _H1)
    cw2, cb2 = linear(keys[4], _H1, _H2)
    cw3, cb3 = linear(keys[5], _H2, 1)
    return {
        "aw1": aw1, "ab1": ab1, "aw2": aw2, "ab2": ab2, "aw3": aw3, "ab3": ab3,
        "cw1": cw1, "cb1": cb1, "cw2": cw2, "cb2": cb2, "cw3": cw3, "cb3": cb3,
    }


def reference_forward(x, params):
    h = jnp.tanh(x @ params["aw1"] + params["ab1"])
    h = jnp.tanh(h @ params["aw2"] + params["ab2"])
    action_mean = h @ params["aw3"] + params["ab3"]
    g = jnp.tanh(x @ params["cw1"] + params["cb1"])
    g = jnp.tanh(g @ params["cw2"] + params["cb2"])
    value = g @ params["cw3"] + params["cb3"]
    return action_mean, value


if __name__ == "__main__":
    state_size = 32
    action_size = 4
    batch = 64            # small demo batch; block_b=32 -> 2 grid steps
    action_std = 0.5

    key = jax.random.PRNGKey(0)
    k_x, k_p = jax.random.split(key)
    x = jax.random.normal(k_x, (batch, state_size), dtype=jnp.float32)
    params = init_params(k_p, state_size, action_size)

    # Pack once; the bf16 slab can stay resident / be reused across calls.
    packed = pack_params(params, state_size, action_size)

    # Constant buffer from the module (not part of the compute hot path).
    action_variance = jnp.full((action_size,), action_std * action_std, jnp.float32)

    action_mean, value = jax.block_until_ready(
        actor_critic_forward(x, packed, action_size, block_b=32)
    )

    ref_action, ref_value = reference_forward(x, params)
    assert action_mean.shape == (batch, action_size)
    assert value.shape == (batch, 1)
    # bf16 MXU operands with f32 accumulation -> relaxed tolerance.
    assert jnp.allclose(action_mean, ref_action, atol=3e-2, rtol=3e-2)
    assert jnp.allclose(value, ref_value, atol=3e-2, rtol=3e-2)
    assert jnp.allclose(action_variance, 0.25)

    print("KERNEL_OK")
</pallas_src>

<mosaic_0001>
module attributes {stable_mosaic.version = 11 : i64} {
  func.func @_actor_critic_kernel(%arg0: i32, %arg1: memref<32x32xbf16, #tpu.memory_space<vmem>>, %arg2: memref<592x128xbf16, #tpu.memory_space<vmem>>, %arg3: memref<32x128xf32, #tpu.memory_space<vmem>>) attributes {dimension_semantics = [#tpu.dimension_semantics<parallel>], iteration_bounds = array<i64: 2>, scalar_prefetch = 0 : i64, scratch_operands = 0 : i64, tpu.core_type = #tpu.core_type<tc>, window_params = [{transform_indices = @transform_0, window_bounds = array<i64: 32, 32>}, {pipeline_mode = #tpu.pipeline_mode<synchronous>, transform_indices = @transform_1, window_bounds = array<i64: 592, 128>}, {transform_indices = @transform_2, window_bounds = array<i64: 32, 128>}]} {
    %c0 = arith.constant 0 : index
    %c0_0 = arith.constant 0 : index
    %0 = vector.load %arg1[%c0, %c0_0] : memref<32x32xbf16, #tpu.memory_space<vmem>>, vector<32x32xbf16>
    %c0_1 = arith.constant 0 : index
    %c0_2 = arith.constant 0 : index
    %1 = vector.load %arg2[%c0_1, %c0_2] : memref<592x128xbf16, #tpu.memory_space<vmem>>, vector<32x128xbf16>
    %c32 = arith.constant 32 : index
    %c0_3 = arith.constant 0 : index
    %2 = vector.load %arg2[%c32, %c0_3] : memref<592x128xbf16, #tpu.memory_space<vmem>>, vector<128x128xbf16>
    %c160 = arith.constant 160 : index
    %c0_4 = arith.constant 0 : index
    %3 = vector.load %arg2[%c160, %c0_4] : memref<592x128xbf16, #tpu.memory_space<vmem>>, vector<128x128xbf16>
    %c288 = arith.constant 288 : index
    %c0_5 = arith.constant 0 : index
    %4 = vector.load %arg2[%c288, %c0_5] : memref<592x128xbf16, #tpu.memory_space<vmem>>, vector<8x128xbf16>
    %5 = arith.extf %4 : vector<8x128xbf16> to vector<8x128xf32>
    %6 = vector.extract_strided_slice %5 {offsets = [0, 0], sizes = [1, 128], strides = [1, 1]} : vector<8x128xf32> to vector<1x128xf32>
    %7 = vector.extract_strided_slice %5 {offsets = [1, 0], sizes = [1, 128], strides = [1, 1]} : vector<8x128xf32> to vector<1x128xf32>
    %8 = vector.extract_strided_slice %5 {offsets = [2, 0], sizes = [1, 128], strides = [1, 1]} : vector<8x128xf32> to vector<1x128xf32>
    %cst = arith.constant dense<0.000000e+00> : vector<32x128xf32>
    %9 = tpu.matmul %0, %1, %cst {dimension_numbers = #tpu.dot_dimension_numbers<[1], [0], [0], [1], [0, 0, 1, 1], [], []>} : vector<32x32xbf16>, vector<32x128xbf16>, vector<32x128xf32> -> vector<32x128xf32>
    %10 = vector.broadcast %6 : vector<1x128xf32> to vector<32x128xf32>
    %11 = arith.addf %9, %10 : vector<32x128xf32>
    %12 = math.tanh %11 : vector<32x128xf32>
    %13 = arith.truncf %12 : vector<32x128xf32> to vector<32x128xbf16>
    %cst_6 = arith.constant dense<0.000000e+00> : vector<32x128xf32>
    %14 = tpu.matmul %13, %2, %cst_6 {dimension_numbers = #tpu.dot_dimension_numbers<[1], [0], [0], [1], [0, 0, 1, 1], [], []>} : vector<32x128xbf16>, vector<128x128xbf16>, vector<32x128xf32> -> vector<32x128xf32>
    %15 = vector.broadcast %7 : vector<1x128xf32> to vector<32x128xf32>
    %16 = arith.addf %14, %15 : vector<32x128xf32>
    %17 = math.tanh %16 : vector<32x128xf32>
    %18 = arith.truncf %17 : vector<32x128xf32> to vector<32x128xbf16>
    %cst_7 = arith.constant dense<0.000000e+00> : vector<32x128xf32>
    %19 = tpu.matmul %18, %3, %cst_7 {dimension_numbers = #tpu.dot_dimension_numbers<[1], [0], [0], [1], [0, 0, 1, 1], [], []>} : vector<32x128xbf16>, vector<128x128xbf16>, vector<32x128xf32> -> vector<32x128xf32>
    %20 = vector.broadcast %8 : vector<1x128xf32> to vector<32x128xf32>
    %21 = arith.addf %19, %20 : vector<32x128xf32>
    %c296 = arith.constant 296 : index
    %c0_8 = arith.constant 0 : index
    %22 = vector.load %arg2[%c296, %c0_8] : memref<592x128xbf16, #tpu.memory_space<vmem>>, vector<32x128xbf16>
    %c328 = arith.constant 328 : index
    %c0_9 = arith.constant 0 : index
    %23 = vector.load %arg2[%c328, %c0_9] : memref<592x128xbf16, #tpu.memory_space<vmem>>, vector<128x128xbf16>
    %c456 = arith.constant 456 : index
    %c0_10 = arith.constant 0 : index
    %24 = vector.load %arg2[%c456, %c0_10] : memref<592x128xbf16, #tpu.memory_space<vmem>>, vector<128x128xbf16>
    %c584 = arith.constant 584 : index
    %c0_11 = arith.constant 0 : index
    %25 = vector.load %arg2[%c584, %c0_11] : memref<592x128xbf16, #tpu.memory_space<vmem>>, vector<8x128xbf16>
    %26 = arith.extf %25 : vector<8x128xbf16> to vector<8x128xf32>
    %27 = vector.extract_strided_slice %26 {offsets = [0, 0], sizes = [1, 128], strides = [1, 1]} : vector<8x128xf32> to vector<1x128xf32>
    %28 = vector.extract_strided_slice %26 {offsets = [1, 0], sizes = [1, 128], strides = [1, 1]} : vector<8x128xf32> to vector<1x128xf32>
    %29 = vector.extract_strided_slice %26 {offsets = [2, 0], sizes = [1, 128], strides = [1, 1]} : vector<8x128xf32> to vector<1x128xf32>
    %cst_12 = arith.constant dense<0.000000e+00> : vector<32x128xf32>
    %30 = tpu.matmul %0, %22, %cst_12 {dimension_numbers = #tpu.dot_dimension_numbers<[1], [0], [0], [1], [0, 0, 1, 1], [], []>} : vector<32x32xbf16>, vector<32x128xbf16>, vector<32x128xf32> -> vector<32x128xf32>
    %31 = vector.broadcast %27 : vector<1x128xf32> to vector<32x128xf32>
    %32 = arith.addf %30, %31 : vector<32x128xf32>
    %33 = math.tanh %32 : vector<32x128xf32>
    %34 = arith.truncf %33 : vector<32x128xf32> to vector<32x128xbf16>
    %cst_13 = arith.constant dense<0.000000e+00> : vector<32x128xf32>
    %35 = tpu.matmul %34, %23, %cst_13 {dimension_numbers = #tpu.dot_dimension_numbers<[1], [0], [0], [1], [0, 0, 1, 1], [], []>} : vector<32x128xbf16>, vector<128x128xbf16>, vector<32x128xf32> -> vector<32x128xf32>
    %36 = vector.broadcast %28 : vector<1x128xf32> to vector<32x128xf32>
    %37 = arith.addf %35, %36 : vector<32x128xf32>
    %38 = math.tanh %37 : vector<32x128xf32>
    %39 = arith.truncf %38 : vector<32x128xf32> to vector<32x128xbf16>
    %cst_14 = arith.constant dense<0.000000e+00> : vector<32x128xf32>
    %40 = tpu.matmul %39, %24, %cst_14 {dimension_numbers = #tpu.dot_dimension_numbers<[1], [0], [0], [1], [0, 0, 1, 1], [], []>} : vector<32x128xbf16>, vector<128x128xbf16>, vector<32x128xf32> -> vector<32x128xf32>
    %41 = vector.broadcast %29 : vector<1x128xf32> to vector<32x128xf32>
    %42 = arith.addf %40, %41 : vector<32x128xf32>
    %43 = arith.addf %21, %42 : vector<32x128xf32>
    %c0_15 = arith.constant 0 : index
    %c0_16 = arith.constant 0 : index
    %44 = vector.load %arg3[%c0_15, %c0_16] : memref<32x128xf32, #tpu.memory_space<vmem>>, vector<32x128xf32>
    tpu.vector_store %arg3[%c0_15, %c0_16], %43 {strides = array<i32>} : memref<32x128xf32, #tpu.memory_space<vmem>>, vector<32x128xf32>,
    return
  }
  func.func @transform_0(%arg0: i32) -> (i32, i32) {
    %c0_i32 = arith.constant 0 : i32
    %c0_i32_0 = arith.constant 0 : i32
    return %arg0, %c0_i32 : i32, i32
  }
  func.func @transform_1(%arg0: i32) -> (i32, i32) {
    %c0_i32 = arith.constant 0 : i32
    %c0_i32_0 = arith.constant 0 : i32
    %c0_i32_1 = arith.constant 0 : i32
    return %c0_i32, %c0_i32_0 : i32, i32
  }
  func.func @transform_2(%arg0: i32) -> (i32, i32) {
    %c0_i32 = arith.constant 0 : i32
    %c0_i32_0 = arith.constant 0 : i32
    return %arg0, %c0_i32 : i32, i32
  }
}

</mosaic_0001>

<llo_original>
// kernel: tpu_custom_call.1
$region0: #{tpu_custom_call.1}
  #allocation0 [shape = 'u32[]', space=smem, size = 0x4, offset = 0x4, fixed_abs, tag = 'smem constant byte address 0x4 - core index']
  #allocation1 [shape = 'u32[144,128]{1,0:T(1,128)}', space=vmem, size = 0x12000, scoped, tag = 'internal scratch']
  %s0 = inlined_call_operand.vmem [shape: bf16[64,32], index: 0, kind: input, shape index: {}]
  %s1 = inlined_call_operand.hbm [shape: bf16[592,128], index: 1, kind: input, shape index: {}]
  %s2 = inlined_call_operand.hbm [shape: f32[64,128], index: 2, kind: output, shape index: {}]
  %s3 = sld [smem:[#allocation0]]
  $region45: #{tpu_custom_call.1} parent=0
    _
  %s5 = ssub.s32 1, %s3
  %s6 = scalar_select 0, %s5, %s3
  $region1: #{tpu_custom_call.1} parent=0
    #allocation2 [shape = 'u8[151552]{0}', space=vmem, size = 0x25000, scoped, tag = 'input window, operand 1, single buffered']
    #allocation3 [shape = 's32[2]{0}', space=sflag, size = 0x8, scoped, tag = 'scoped memory for tpu_custom_call.1']
    #allocation4 [shape = 's32[2]{0}', space=sflag, size = 0x8, scoped, tag = 'scoped memory for tpu_custom_call.1']
    #allocation5 [shape = 'u8[32768]{0}', space=vmem, size = 0x8000, scoped, tag = 'output window, operand 0']
    %7 = vsyncpa [#allocation3], 0
    %8 = vsyncpa [#allocation4], 0
    %s9 = scalar_lea.sflag [#allocation4], 1
    %10 = vsyncpa %s9, 0
    loop: start=0, step=1, limit=4
    $region2: #{tpu_custom_call.1} parent=1 // loop_pre_header
      _
    $region3: #{tpu_custom_call.1} parent=1 // loop_header
      %s12 = sphi 0, %s16
      %p13 = scmp.ge.s32.totalorder %s12, 4
      %s22 = sphi 0, %s24
      %s25 = sphi 0, %s22
      %s26 = sphi 0, %s25
      %s42 = sphi 0, %s26
      %s46 = sphi 0, %s46
      %s48 = sphi 0, %s46
      %s49 = sphi 0, %s48
      %s63 = sphi 0, %s49
      %s69 = sphi 0, %s71
      %s72 = sphi 0, %s69
      %s73 = sphi 0, %s72
      %s89 = sphi 0, %s73
    $region4: #{tpu_custom_call.1} parent=1 // loop_header_branch
      %15 = sbr.rel (%p13) target = $region8
    $region5: #{tpu_custom_call.1} parent=1 // loop_body
      %s17 = ssub.s32 %s12, 1
      %s18 = ssub.s32 %s12, 2
      %s19 = sadd.s32 %s12, 1
      %s20 = ssub.s32 %s12, %s19
      %p21 = scmp.eq.s32.totalorder %s20, 0
      %s23 = sadd.s32 %s22, 1
      %s24 = scalar_select %p21, %s22, %s23
      %p27 = pneg %p21
      %p28 = scmp.eq.s32.totalorder %s12, 1
      %p29 = por %p27, %p28
      %p30 = scmp.ne.s32.totalorder %s22, %s25
      %p31 = scmp.eq.s32.totalorder %s12, 0
      %p32 = por %p30, %p31
      %p33 = scmp.ne.s32.totalorder %s22, %s25
      %p34 = scmp.eq.s32.totalorder %s17, 1
      %p35 = por %p33, %p34
      %p36 = scmp.ne.s32.totalorder %s25, %s26
      %p37 = scmp.eq.s32.totalorder %s17, 0
      %p38 = por %p36, %p37
      %p39 = scmp.ne.s32.totalorder %s25, %s26
      %p40 = scmp.eq.s32.totalorder %s18, 1
      %p41 = por %p39, %p40
      %p43 = scmp.ne.s32.totalorder %s26, %s42
      %p44 = scmp.eq.s32.totalorder %s18, 0
      %p45 = por %p43, %p44
      %s47 = sadd.s32 %s46, 1
      %p50 = scmp.eq.s32.totalorder %s12, 1
      %p51 = scmp.ne.s32.totalorder %s46, %s48
      %p52 = scmp.eq.s32.totalorder %s12, 0
      %p53 = por %p51, %p52
      %p54 = scmp.ne.s32.totalorder %s46, %s48
      %p55 = scmp.eq.s32.totalorder %s17, 1
      %p56 = por %p54, %p55
      %p57 = scmp.ne.s32.totalorder %s48, %s49
      %p58 = scmp.eq.s32.totalorder %s17, 0
      %p59 = por %p57, %p58
      %p60 = scmp.ne.s32.totalorder %s48, %s49
      %p61 = scmp.eq.s32.totalorder %s18, 1
      %p62 = por %p60, %p61
      %p64 = scmp.ne.s32.totalorder %s49, %s63
      %p65 = scmp.eq.s32.totalorder %s18, 0
      %p66 = por %p64, %p65
      %s67 = ssub.s32 %s12, %s19
      %p68 = scmp.eq.s32.totalorder %s67, 0
      %s70 = sadd.s32 %s69, 1
      %s71 = scalar_select %p68, %s69, %s70
      %p74 = pneg %p68
      %p75 = scmp.eq.s32.totalorder %s12, 1
      %p76 = por %p74, %p75
      %p77 = scmp.ne.s32.totalorder %s69, %s72
      %p78 = scmp.eq.s32.totalorder %s12, 0
      %p79 = por %p77, %p78
      %p80 = scmp.ne.s32.totalorder %s69, %s72
      %p81 = scmp.eq.s32.totalorder %s17, 1
      %p82 = por %p80, %p81
      %p83 = scmp.ne.s32.totalorder %s72, %s73
      %p84 = scmp.eq.s32.totalorder %s17, 0
      %p85 = por %p83, %p84
      %p86 = scmp.ne.s32.totalorder %s72, %s73
      %p87 = scmp.eq.s32.totalorder %s18, 1
      %p88 = por %p86, %p87
      %p90 = scmp.ne.s32.totalorder %s73, %s89
      %p91 = scmp.eq.s32.totalorder %s18, 0
      %p92 = por %p90, %p91
      %p93 = scmp.le.s32.totalorder 1, %s12
      %p94 = scmp.lt.s32.totalorder %s12, 3
      %p95 = pnand %p93, %p94
      %p96 = pneg %p95
      // Predicated region
      $region9: #{tpu_custom_call.1} parent=5 // pred_check
        _
      $region10: #{tpu_custom_call.1} parent=5 // pred_check_branch
        %98 = sbr.rel (%p95) target = $region12
      $region11: #{tpu_custom_call.1} parent=5 // pred_region
        %s99 = ssub.s32 %s12, 1
        // Predicated region
        $region13: #{tpu_custom_call.1} parent=11 // pred_check
          %p100 = pneg %p59
        $region14: #{tpu_custom_call.1} parent=11 // pred_check_branch
          %102 = sbr.rel (%p100) target = $region16
        $region15: #{tpu_custom_call.1} parent=11 // pred_region
          %s104 = ssub.s32 4736, 4736
          %105 = vsyncadd [#allocation3], %s104
          %s106 = sshll.u32 [#allocation2], 4
          %s107 = int_to_ptr.vmem [resolvable:$true] %s106
          %112 = dma.hbm_to_vmem [thread:$0]  %s1, 4736, %s107, [#allocation3], 64, 64, 4
        $region16: #{tpu_custom_call.1} parent=11 // pred_fallthru
          _
      $region12: #{tpu_custom_call.1} parent=5 // pred_fallthru
        _
      %p113 = scmp.lt.s32.totalorder %s12, 2
      // Predicated region
      $region17: #{tpu_custom_call.1} parent=5 // pred_check
        %p114 = pneg %p113
      $region18: #{tpu_custom_call.1} parent=5 // pred_check_branch
        %116 = sbr.rel (%p114) target = $region20
      $region19: #{tpu_custom_call.1} parent=5 // pred_region
        // Predicated region
        $region21: #{tpu_custom_call.1} parent=19 // pred_check
          %p117 = pneg %p32
        $region22: #{tpu_custom_call.1} parent=19 // pred_check_branch
          %119 = sbr.rel (%p117) target = $region24
        $region23: #{tpu_custom_call.1} parent=19 // pred_region
          %s120 = smul.u32 4, %s12
          %p121 = scmp.lt.s32.totalorder %s120, 7
          %s122 = scalar_select %p121, %s120, 7
          %s123 = smul.addr %s122, 4
          %s124 = scalar_lea.vmem %s0, %s123
          %s125 = smul.u32 4, %s12
        $region24: #{tpu_custom_call.1} parent=19 // pred_fallthru
          _
      $region20: #{tpu_custom_call.1} parent=5 // pred_fallthru
        _
      %p126 = scmp.le.s32.totalorder 1, %s12
      %p127 = scmp.lt.s32.totalorder %s12, 3
      %p128 = pnand %p126, %p127
      %p129 = pneg %p128
      // Predicated region
      $region25: #{tpu_custom_call.1} parent=5 // pred_check
        _
      $region26: #{tpu_custom_call.1} parent=5 // pred_check_branch
        %131 = sbr.rel (%p128) target = $region28
      $region27: #{tpu_custom_call.1} parent=5 // pred_region
        %s132 = ssub.s32 %s12, 1
        // Predicated region
        $region29: #{tpu_custom_call.1} parent=27 // pred_check
          %p133 = pneg %p59
        $region30: #{tpu_custom_call.1} parent=27 // pred_check_branch
          %135 = sbr.rel (%p133) target = $region32
        $region31: #{tpu_custom_call.1} parent=27 // pred_region
          %136 = dma.done [#allocation3], 4736
        $region32: #{tpu_custom_call.1} parent=27 // pred_fallthru
          _
        %s137 = smul.u32 4, %s17
        %p138 = scmp.lt.s32.totalorder %s137, 7
        %s139 = scalar_select %p138, %s137, 7
        %s140 = smul.addr %s139, 4
        %s141 = scalar_lea.vmem %s0, %s140
        %p142 = pneg %p38
        %p143 = pneg %p35
        %p144 = pneg %p59
        %p145 = pneg %p56
        %p146 = pneg %p85
        %p147 = pneg %p82
        %s148 = sand.u32 %s72, 1
        %s149 = scalar_lea.sflag [#allocation4], %s148
        %s150 = sand.u32 %s72, 1
        %s151 = smul.addr %s150, 32
        %s152 = scalar_lea.vmem [#allocation5], %s151
        %s153 = smul.u32 4, %s17
        %p154 = scmp.lt.s32.totalorder %s153, 7
        %s155 = scalar_select %p154, %s153, 7
        %s156 = smul.addr %s155, 4
        %s157 = scalar_lea.vmem %s0, %s156
        %s158 = smul.u32 4, %s17
        %s159 = smul.u32 4, %s17
        %v161 = vld [vmem:[%s157] sm:$0xf]
        %v162 = vld [vmem:[%s157 + $0x4] sm:$0xf]
        %v163 = vld [vmem:[%s157 + $0x8] sm:$0xf]
        %v164 = vld [vmem:[%s157 + $0xc] sm:$0xf]
        %v165 = vld [vmem:[#allocation2] sm:$0xf]
        %v166 = vld [vmem:[#allocation2 + $0x4] sm:$0xf]
        %v167 = vld [vmem:[#allocation2 + $0x8] sm:$0xf]
        %v168 = vld [vmem:[#allocation2 + $0xc] sm:$0xf]
        %v169 = vld [vmem:[#allocation2 + $0x10] sm:$0xf]
        %v170 = vld [vmem:[#allocation2 + $0x14] sm:$0xf]
        %v171 = vld [vmem:[#allocation2 + $0x18] sm:$0xf]
        %v172 = vld [vmem:[#allocation2 + $0x1c] sm:$0xf]
        %v173 = vld [vmem:[#allocation2 + $0x20] sm:$0xf]
        %v174 = vld [vmem:[#allocation2 + $0x24] sm:$0xf]
        %v175 = vld [vmem:[#allocation2 + $0x28] sm:$0xf]
        %v176 = vld [vmem:[#allocation2 + $0x2c] sm:$0xf]
        %v177 = vld [vmem:[#allocation2 + $0x30] sm:$0xf]
        %v178 = vld [vmem:[#allocation2 + $0x34] sm:$0xf]
        %v179 = vld [vmem:[#allocation2 + $0x38] sm:$0xf]
        %v180 = vld [vmem:[#allocation2 + $0x3c] sm:$0xf]
        %v181 = vld [vmem:[#allocation2 + $0x40] sm:$0xf]
        %v182 = vld [vmem:[#allocation2 + $0x44] sm:$0xf]
        %v183 = vld [vmem:[#allocation2 + $0x48] sm:$0xf]
        %v184 = vld [vmem:[#allocation2 + $0x4c] sm:$0xf]
        %v185 = vld [vmem:[#allocation2 + $0x50] sm:$0xf]
        %v186 = vld [vmem:[#allocation2 + $0x54] sm:$0xf]
        %v187 = vld [vmem:[#allocation2 + $0x58] sm:$0xf]
        %v188 = vld [vmem:[#allocation2 + $0x5c] sm:$0xf]
        %v189 = vld [vmem:[#allocation2 + $0x60] sm:$0xf]
        %v190 = vld [vmem:[#allocation2 + $0x64] sm:$0xf]
        %v191 = vld [vmem:[#allocation2 + $0x68] sm:$0xf]
        %v192 = vld [vmem:[#allocation2 + $0x6c] sm:$0xf]
        %v193 = vld [vmem:[#allocation2 + $0x70] sm:$0xf]
        %v194 = vld [vmem:[#allocation2 + $0x74] sm:$0xf]
        %v195 = vld [vmem:[#allocation2 + $0x78] sm:$0xf]
        %v196 = vld [vmem:[#allocation2 + $0x7c] sm:$0xf]
        %v197 = vld [vmem:[#allocation2 + $0x80] sm:$0xf]
        %v198 = vld [vmem:[#allocation2 + $0x84] sm:$0xf]
        %v199 = vld [vmem:[#allocation2 + $0x88] sm:$0xf]
        %v200 = vld [vmem:[#allocation2 + $0x8c] sm:$0xf]
        %v201 = vld [vmem:[#allocation2 + $0x90] sm:$0xf]
        %v202 = vunpack.c.l.bf16 %v201
        %v203 = vlaneseq
        %v204 = vshrl.u32 %v203, 7
        %v205 = vsub.s32 0, %v204
        %v206 = vrot.slane %v202, %v205
        %v211 = vunpack.c.l.b16 %v161
        %v212 = vunpack.c.l.b16 %v162
        %v213 = vunpack.c.l.b16 %v163
        %v214 = vunpack.c.l.b16 %v164
        %v215 = vpack.c.b16 %v212, %v211
        %v216 = vpack.c.b16 %v214, %v213
        %v221 = vunpack.c.l.b16 %v165
        %v222 = vunpack.c.l.b16 %v166
        %v223 = vunpack.c.l.b16 %v167
        %v224 = vunpack.c.l.b16 %v168
        %v225 = vpack.c.b16 %v222, %v221
        %v226 = vpack.c.b16 %v224, %v223
        %vm229 = vcmask 261120
        %v231 = vsel %vm229, %v215, 0
        %v234 = vsel %vm229, %v216, 0
        %236 = vmatprep.subr.bf16.mxu0 0
        %237 = vmatpush1.bf16.msra.mxu0 0
        %238 = vmatprep.subr.bf16.mxu0 0
        %239 = vmatpush1.bf16.msra.mxu0 0
        %240 = vmatprep.subr.bf16.mxu0 0
        %241 = vmatpush1.bf16.msra.mxu0 0
        %242 = vmatprep.subr.bf16.mxu0 0
        %243 = vmatpush1.bf16.msra.mxu0 0
        %244 = vmatprep.subr.bf16.mxu0 0
        %245 = vmatpush1.bf16.msra.mxu0 0
        %246 = vmatprep.subr.bf16.mxu0 0
        %247 = vmatpush1.bf16.msra.mxu0 0
        %248 = vmatprep.subr.bf16.mxu0 0
        %249 = vmatpush1.bf16.msra.mxu0 %v226
        %250 = vmatprep.subr.bf16.mxu0 0
        %251 = vmatpush1.bf16.msra.mxu0 %v225
        %252 = vmatprep.subr.bf16.mxu0 0
        %253 = vmatpush2.bf16.msra.mxu0 0
        %254 = vmatprep.subr.bf16.mxu0 0
        %255 = vmatpush2.bf16.msra.mxu0 0
        %256 = vmatprep.subr.bf16.mxu0 0
        %257 = vmatpush2.bf16.msra.mxu0 0
        %258 = vmatprep.subr.bf16.mxu0 0
        %259 = vmatpush2.bf16.msra.mxu0 0
        %260 = vmatprep.subr.bf16.mxu0 0
        %261 = vmatpush2.bf16.msra.mxu0 0
        %262 = vmatprep.subr.bf16.mxu0 0
        %263 = vmatpush2.bf16.msra.mxu0 0
        %264 = vmatprep.subr.bf16.mxu0 0
        %265 = vmatpush2.bf16.msra.mxu0 0
        %266 = vmatprep.subr.bf16.mxu0 0
        %267 = vmatpush2.bf16.msra.mxu0 0
        %268 = vmatprep.mubr.bf16.mxu0 0
        %269 = vmatmul.mubr.bf16.gmra.mxu0 %v231
        %v270 = vpop.f32.mrf.mxu0
        %v271 = vadd.f32 %v206, %v270
        %v272 = vpop.f32.mrf.mxu0
        %v273 = vpop.f32.mrf.mxu0
        %v274 = vadd.f32 %v206, %v273
        %v275 = vpop.f32.mrf.mxu0
        %276 = vmatprep.mubr.bf16.mxu0 0
        %277 = vmatmul.mubr.bf16.gmra.mxu0 %v234
        %v278 = vpop.f32.mrf.mxu0
        %v279 = vadd.f32 %v206, %v278
        %v280 = vpop.f32.mrf.mxu0
        %v281 = vpop.f32.mrf.mxu0
        %v282 = vadd.f32 %v206, %v281
        %v283 = vpop.f32.mrf.mxu0
        %284 = vdwg.mxu0
        %v285 = vtanh.pop %v271
        %v286 = vtanh.pop %v274
        %v287 = vtanh.pop %v279
        %v288 = vtanh.pop %v282
        %v289 = vpack.c.bf16 %v286, %v285
        %v290 = vpack.c.bf16 %v288, %v287
        %v291 = vlaneseq
        %v292 = vshrl.u32 %v291, 7
        %v293 = vsub.s32 1, %v292
        %v294 = vrot.slane %v202, %v293
        %v311 = vunpack.c.l.b16 %v169
        %v312 = vunpack.c.l.b16 %v170
        %v313 = vunpack.c.l.b16 %v171
        %v314 = vunpack.c.l.b16 %v172
        %v315 = vunpack.c.l.b16 %v173
        %v316 = vunpack.c.l.b16 %v174
        %v317 = vunpack.c.l.b16 %v175
        %v318 = vunpack.c.l.b16 %v176
        %v319 = vunpack.c.l.b16 %v177
        %v320 = vunpack.c.l.b16 %v178
        %v321 = vunpack.c.l.b16 %v179
        %v322 = vunpack.c.l.b16 %v180
        %v323 = vunpack.c.l.b16 %v181
        %v324 = vunpack.c.l.b16 %v182
        %v325 = vunpack.c.l.b16 %v183
        %v326 = vunpack.c.l.b16 %v184
        %v327 = vpack.c.b16 %v312, %v311
        %v328 = vpack.c.b16 %v314, %v313
        %v329 = vpack.c.b16 %v316, %v315
        %v330 = vpack.c.b16 %v318, %v317
        %v331 = vpack.c.b16 %v320, %v319
        %v332 = vpack.c.b16 %v322, %v321
        %v333 = vpack.c.b16 %v324, %v323
        %v334 = vpack.c.b16 %v326, %v325
        %343 = vmatprep.subr.bf16.mxu0 0
        %344 = vmatpush1.bf16.msra.mxu0 %v334
        %345 = vmatprep.subr.bf16.mxu0 0
        %346 = vmatpush1.bf16.msra.mxu0 %v333
        %347 = vmatprep.subr.bf16.mxu0 0
        %348 = vmatpush1.bf16.msra.mxu0 %v332
        %349 = vmatprep.subr.bf16.mxu0 0
        %350 = vmatpush1.bf16.msra.mxu0 %v331
        %351 = vmatprep.subr.bf16.mxu0 0
        %352 = vmatpush1.bf16.msra.mxu0 %v330
        %353 = vmatprep.subr.bf16.mxu0 0
        %354 = vmatpush1.bf16.msra.mxu0 %v329
        %355 = vmatprep.subr.bf16.mxu0 0
        %356 = vmatpush1.bf16.msra.mxu0 %v328
        %357 = vmatprep.subr.bf16.mxu0 0
        %358 = vmatpush1.bf16.msra.mxu0 %v327
        %359 = vmatprep.subr.bf16.mxu0 0
        %360 = vmatpush2.bf16.msra.mxu0 0
        %361 = vmatprep.subr.bf16.mxu0 0
        %362 = vmatpush2.bf16.msra.mxu0 0
        %363 = vmatprep.subr.bf16.mxu0 0
        %364 = vmatpush2.bf16.msra.mxu0 0
        %365 = vmatprep.subr.bf16.mxu0 0
        %366 = vmatpush2.bf16.msra.mxu0 0
        %367 = vmatprep.subr.bf16.mxu0 0
        %368 = vmatpush2.bf16.msra.mxu0 0
        %369 = vmatprep.subr.bf16.mxu0 0
        %370 = vmatpush2.bf16.msra.mxu0 0
        %371 = vmatprep.subr.bf16.mxu0 0
        %372 = vmatpush2.bf16.msra.mxu0 0
        %373 = vmatprep.subr.bf16.mxu0 0
        %374 = vmatpush2.bf16.msra.mxu0 0
        %375 = vmatprep.mubr.bf16.mxu0 0
        %376 = vmatmul.mubr.bf16.gmra.mxu0 %v289
        %v377 = vpop.f32.mrf.mxu0
        %v378 = vadd.f32 %v294, %v377
        %v379 = vpop.f32.mrf.mxu0
        %v380 = vpop.f32.mrf.mxu0
        %v381 = vadd.f32 %v294, %v380
        %v382 = vpop.f32.mrf.mxu0
        %383 = vmatprep.mubr.bf16.mxu0 0
        %384 = vmatmul.mubr.bf16.gmra.mxu0 %v290
        %v385 = vpop.f32.mrf.mxu0
        %v386 = vadd.f32 %v294, %v385
        %v387 = vpop.f32.mrf.mxu0
        %v388 = vpop.f32.mrf.mxu0
        %v389 = vadd.f32 %v294, %v388
        %v390 = vpop.f32.mrf.mxu0
        %391 = vdwg.mxu0
        %v392 = vtanh.pop %v378
        %v393 = vtanh.pop %v381
        %v394 = vtanh.pop %v386
        %v395 = vtanh.pop %v389
        %v396 = vpack.c.bf16 %v393, %v392
        %v397 = vpack.c.bf16 %v395, %v394
        %v398 = vlaneseq
        %v399 = vshrl.u32 %v398, 7
        %v400 = vsub.s32 2, %v399
        %v401 = vrot.slane %v202, %v400
        %v418 = vunpack.c.l.b16 %v185
        %v419 = vunpack.c.l.b16 %v186
        %v420 = vunpack.c.l.b16 %v187
        %v421 = vunpack.c.l.b16 %v188
        %v422 = vunpack.c.l.b16 %v189
        %v423 = vunpack.c.l.b16 %v190
        %v424 = vunpack.c.l.b16 %v191
        %v425 = vunpack.c.l.b16 %v192
        %v426 = vunpack.c.l.b16 %v193
        %v427 = vunpack.c.l.b16 %v194
        %v428 = vunpack.c.l.b16 %v195
        %v429 = vunpack.c.l.b16 %v196
        %v430 = vunpack.c.l.b16 %v197
        %v431 = vunpack.c.l.b16 %v198
        %v432 = vunpack.c.l.b16 %v199
        %v433 = vunpack.c.l.b16 %v200
        %v434 = vpack.c.b16 %v419, %v418
        %v435 = vpack.c.b16 %v421, %v420
        %v436 = vpack.c.b16 %v423, %v422
        %v437 = vpack.c.b16 %v425, %v424
        %v438 = vpack.c.b16 %v427, %v426
        %v439 = vpack.c.b16 %v429, %v428
        %v440 = vpack.c.b16 %v431, %v430
        %v441 = vpack.c.b16 %v433, %v432
        %450 = vmatprep.subr.bf16.mxu0 0
        %451 = vmatpush1.bf16.msra.mxu0 %v441
        %452 = vmatprep.subr.bf16.mxu0 0
        %453 = vmatpush1.bf16.msra.mxu0 %v440
        %454 = vmatprep.subr.bf16.mxu0 0
        %455 = vmatpush1.bf16.msra.mxu0 %v439
        %456 = vmatprep.subr.bf16.mxu0 0
        %457 = vmatpush1.bf16.msra.mxu0 %v438
        %458 = vmatprep.subr.bf16.mxu0 0
        %459 = vmatpush1.bf16.msra.mxu0 %v437
        %460 = vmatprep.subr.bf16.mxu0 0
        %461 = vmatpush1.bf16.msra.mxu0 %v436
        %462 = vmatprep.subr.bf16.mxu0 0
        %463 = vmatpush1.bf16.msra.mxu0 %v435
        %464 = vmatprep.subr.bf16.mxu0 0
        %465 = vmatpush1.bf16.msra.mxu0 %v434
        %466 = vmatprep.subr.bf16.mxu0 0
        %467 = vmatpush2.bf16.msra.mxu0 0
        %468 = vmatprep.subr.bf16.mxu0 0
        %469 = vmatpush2.bf16.msra.mxu0 0
        %470 = vmatprep.subr.bf16.mxu0 0
        %471 = vmatpush2.bf16.msra.mxu0 0
        %472 = vmatprep.subr.bf16.mxu0 0
        %473 = vmatpush2.bf16.msra.mxu0 0
        %474 = vmatprep.subr.bf16.mxu0 0
        %475 = vmatpush2.bf16.msra.mxu0 0
        %476 = vmatprep.subr.bf16.mxu0 0
        %477 = vmatpush2.bf16.msra.mxu0 0
        %478 = vmatprep.subr.bf16.mxu0 0
        %479 = vmatpush2.bf16.msra.mxu0 0
        %480 = vmatprep.subr.bf16.mxu0 0
        %481 = vmatpush2.bf16.msra.mxu0 0
        %482 = vmatprep.mubr.bf16.mxu0 0
        %483 = vmatmul.mubr.bf16.gmra.mxu0 %v396
        %v484 = vpop.f32.mrf.mxu0
        %v485 = vadd.f32 %v401, %v484
        %v486 = vpop.f32.mrf.mxu0
        %v487 = vpop.f32.mrf.mxu0
        %v488 = vadd.f32 %v401, %v487
        %v489 = vpop.f32.mrf.mxu0
        %490 = vmatprep.mubr.bf16.mxu0 0
        %491 = vmatmul.mubr.bf16.gmra.mxu0 %v397
        %v492 = vpop.f32.mrf.mxu0
        %v493 = vadd.f32 %v401, %v492
        %v494 = vpop.f32.mrf.mxu0
        %v495 = vpop.f32.mrf.mxu0
        %v496 = vadd.f32 %v401, %v495
        %v497 = vpop.f32.mrf.mxu0
        %498 = vdwg.mxu0
        %v499 = vld [vmem:[#allocation2 + $0x94] sm:$0xf]
        %v500 = vld [vmem:[#allocation2 + $0x98] sm:$0xf]
        %v501 = vld [vmem:[#allocation2 + $0x9c] sm:$0xf]
        %v502 = vld [vmem:[#allocation2 + $0xa0] sm:$0xf]
        %v503 = vld [vmem:[#allocation2 + $0xa4] sm:$0xf]
        %v504 = vld [vmem:[#allocation2 + $0xa8] sm:$0xf]
        %v505 = vld [vmem:[#allocation2 + $0xac] sm:$0xf]
        %v506 = vld [vmem:[#allocation2 + $0xb0] sm:$0xf]
        %v507 = vld [vmem:[#allocation2 + $0xb4] sm:$0xf]
        %v508 = vld [vmem:[#allocation2 + $0xb8] sm:$0xf]
        %v509 = vld [vmem:[#allocation2 + $0xbc] sm:$0xf]
        %v510 = vld [vmem:[#allocation2 + $0xc0] sm:$0xf]
        %v511 = vld [vmem:[#allocation2 + $0xc4] sm:$0xf]
        %v512 = vld [vmem:[#allocation2 + $0xc8] sm:$0xf]
        %v513 = vld [vmem:[#allocation2 + $0xcc] sm:$0xf]
        %v514 = vld [vmem:[#allocation2 + $0xd0] sm:$0xf]
        %v515 = vld [vmem:[#allocation2 + $0xd4] sm:$0xf]
        %v516 = vld [vmem:[#allocation2 + $0xd8] sm:$0xf]
        %v517 = vld [vmem:[#allocation2 + $0xdc] sm:$0xf]
        %v518 = vld [vmem:[#allocation2 + $0xe0] sm:$0xf]
        %v519 = vld [vmem:[#allocation2 + $0xe4] sm:$0xf]
        %v520 = vld [vmem:[#allocation2 + $0xe8] sm:$0xf]
        %v521 = vld [vmem:[#allocation2 + $0xec] sm:$0xf]
        %v522 = vld [vmem:[#allocation2 + $0xf0] sm:$0xf]
        %v523 = vld [vmem:[#allocation2 + $0xf4] sm:$0xf]
        %v524 = vld [vmem:[#allocation2 + $0xf8] sm:$0xf]
        %v525 = vld [vmem:[#allocation2 + $0xfc] sm:$0xf]
        %v526 = vld [vmem:[#allocation2 + $0x100] sm:$0xf]
        %v527 = vld [vmem:[#allocation2 + $0x104] sm:$0xf]
        %v528 = vld [vmem:[#allocation2 + $0x108] sm:$0xf]
        %v529 = vld [vmem:[#allocation2 + $0x10c] sm:$0xf]
        %v530 = vld [vmem:[#allocation2 + $0x110] sm:$0xf]
        %v531 = vld [vmem:[#allocation2 + $0x114] sm:$0xf]
        %v532 = vld [vmem:[#allocation2 + $0x118] sm:$0xf]
        %v533 = vld [vmem:[#allocation2 + $0x11c] sm:$0xf]
        %v534 = vld [vmem:[#allocation2 + $0x120] sm:$0xf]
        %v535 = vld [vmem:[#allocation2 + $0x124] sm:$0xf]
        %v536 = vunpack.c.l.bf16 %v535
        %v537 = vlaneseq
        %v538 = vshrl.u32 %v537, 7
        %v539 = vsub.s32 0, %v538
        %v540 = vrot.slane %v536, %v539
        %v545 = vunpack.c.l.b16 %v499
        %v546 = vunpack.c.l.b16 %v500
        %v547 = vunpack.c.l.b16 %v501
        %v548 = vunpack.c.l.b16 %v502
        %v549 = vpack.c.b16 %v546, %v545
        %v550 = vpack.c.b16 %v548, %v547
        %553 = vmatprep.subr.bf16.mxu0 0
        %554 = vmatpush1.bf16.msra.mxu0 0
        %555 = vmatprep.subr.bf16.mxu0 0
        %556 = vmatpush1.bf16.msra.mxu0 0
        %557 = vmatprep.subr.bf16.mxu0 0
        %558 = vmatpush1.bf16.msra.mxu0 0
        %559 = vmatprep.subr.bf16.mxu0 0
        %560 = vmatpush1.bf16.msra.mxu0 0
        %561 = vmatprep.subr.bf16.mxu0 0
        %562 = vmatpush1.bf16.msra.mxu0 0
        %563 = vmatprep.subr.bf16.mxu0 0
        %564 = vmatpush1.bf16.msra.mxu0 0
        %565 = vmatprep.subr.bf16.mxu0 0
        %566 = vmatpush1.bf16.msra.mxu0 %v550
        %567 = vmatprep.subr.bf16.mxu0 0
        %568 = vmatpush1.bf16.msra.mxu0 %v549
        %569 = vmatprep.subr.bf16.mxu0 0
        %570 = vmatpush2.bf16.msra.mxu0 0
        %571 = vmatprep.subr.bf16.mxu0 0
        %572 = vmatpush2.bf16.msra.mxu0 0
        %573 = vmatprep.subr.bf16.mxu0 0
        %574 = vmatpush2.bf16.msra.mxu0 0
        %575 = vmatprep.subr.bf16.mxu0 0
        %576 = vmatpush2.bf16.msra.mxu0 0
        %577 = vmatprep.subr.bf16.mxu0 0
        %578 = vmatpush2.bf16.msra.mxu0 0
        %579 = vmatprep.subr.bf16.mxu0 0
        %580 = vmatpush2.bf16.msra.mxu0 0
        %581 = vmatprep.subr.bf16.mxu0 0
        %582 = vmatpush2.bf16.msra.mxu0 0
        %583 = vmatprep.subr.bf16.mxu0 0
        %584 = vmatpush2.bf16.msra.mxu0 0
        %585 = vmatprep.mubr.bf16.mxu0 0
        %586 = vmatmul.mubr.bf16.gmra.mxu0 %v231
        %v587 = vpop.f32.mrf.mxu0
        %v588 = vadd.f32 %v540, %v587
        %v589 = vpop.f32.mrf.mxu0
        %v590 = vpop.f32.mrf.mxu0
        %v591 = vadd.f32 %v540, %v590
        %v592 = vpop.f32.mrf.mxu0
        %593 = vmatprep.mubr.bf16.mxu0 0
        %594 = vmatmul.mubr.bf16.gmra.mxu0 %v234
        %v595 = vpop.f32.mrf.mxu0
        %v596 = vadd.f32 %v540, %v595
        %v597 = vpop.f32.mrf.mxu0
        %v598 = vpop.f32.mrf.mxu0
        %v599 = vadd.f32 %v540, %v598
        %v600 = vpop.f32.mrf.mxu0
        %601 = vdwg.mxu0
        %v602 = vtanh.pop %v588
        %v603 = vtanh.pop %v591
        %v604 = vtanh.pop %v596
        %v605 = vtanh.pop %v599
        %v606 = vpack.c.bf16 %v603, %v602
        %v607 = vpack.c.bf16 %v605, %v604
        %v608 = vlaneseq
        %v609 = vshrl.u32 %v608, 7
        %v610 = vsub.s32 1, %v609
        %v611 = vrot.slane %v536, %v610
        %v628 = vunpack.c.l.b16 %v503
        %v629 = vunpack.c.l.b16 %v504
        %v630 = vunpack.c.l.b16 %v505
        %v631 = vunpack.c.l.b16 %v506
        %v632 = vunpack.c.l.b16 %v507
        %v633 = vunpack.c.l.b16 %v508
        %v634 = vunpack.c.l.b16 %v509
        %v635 = vunpack.c.l.b16 %v510
        %v636 = vunpack.c.l.b16 %v511
        %v637 = vunpack.c.l.b16 %v512
        %v638 = vunpack.c.l.b16 %v513
        %v639 = vunpack.c.l.b16 %v514
        %v640 = vunpack.c.l.b16 %v515
        %v641 = vunpack.c.l.b16 %v516
        %v642 = vunpack.c.l.b16 %v517
        %v643 = vunpack.c.l.b16 %v518
        %v644 = vpack.c.b16 %v629, %v628
        %v645 = vpack.c.b16 %v631, %v630
        %v646 = vpack.c.b16 %v633, %v632
        %v647 = vpack.c.b16 %v635, %v634
        %v648 = vpack.c.b16 %v637, %v636
        %v649 = vpack.c.b16 %v639, %v638
        %v650 = vpack.c.b16 %v641, %v640
        %v651 = vpack.c.b16 %v643, %v642
        %660 = vmatprep.subr.bf16.mxu0 0
        %661 = vmatpush1.bf16.msra.mxu0 %v651
        %662 = vmatprep.subr.bf16.mxu0 0
        %663 = vmatpush1.bf16.msra.mxu0 %v650
        %664 = vmatprep.subr.bf16.mxu0 0
        %665 = vmatpush1.bf16.msra.mxu0 %v649
        %666 = vmatprep.subr.bf16.mxu0 0
        %667 = vmatpush1.bf16.msra.mxu0 %v648
        %668 = vmatprep.subr.bf16.mxu0 0
        %669 = vmatpush1.bf16.msra.mxu0 %v647
        %670 = vmatprep.subr.bf16.mxu0 0
        %671 = vmatpush1.bf16.msra.mxu0 %v646
        %672 = vmatprep.subr.bf16.mxu0 0
        %673 = vmatpush1.bf16.msra.mxu0 %v645
        %674 = vmatprep.subr.bf16.mxu0 0
        %675 = vmatpush1.bf16.msra.mxu0 %v644
        %676 = vmatprep.subr.bf16.mxu0 0
        %677 = vmatpush2.bf16.msra.mxu0 0
        %678 = vmatprep.subr.bf16.mxu0 0
        %679 = vmatpush2.bf16.msra.mxu0 0
        %680 = vmatprep.subr.bf16.mxu0 0
        %681 = vmatpush2.bf16.msra.mxu0 0
        %682 = vmatprep.subr.bf16.mxu0 0
        %683 = vmatpush2.bf16.msra.mxu0 0
        %684 = vmatprep.subr.bf16.mxu0 0
        %685 = vmatpush2.bf16.msra.mxu0 0
        %686 = vmatprep.subr.bf16.mxu0 0
        %687 = vmatpush2.bf16.msra.mxu0 0
        %688 = vmatprep.subr.bf16.mxu0 0
        %689 = vmatpush2.bf16.msra.mxu0 0
        %690 = vmatprep.subr.bf16.mxu0 0
        %691 = vmatpush2.bf16.msra.mxu0 0
        %692 = vmatprep.mubr.bf16.mxu0 0
        %693 = vmatmul.mubr.bf16.gmra.mxu0 %v606
        %v694 = vpop.f32.mrf.mxu0
        %v695 = vadd.f32 %v611, %v694
        %v696 = vpop.f32.mrf.mxu0
        %v697 = vpop.f32.mrf.mxu0
        %v698 = vadd.f32 %v611, %v697
        %v699 = vpop.f32.mrf.mxu0
        %700 = vmatprep.mubr.bf16.mxu0 0
        %701 = vmatmul.mubr.bf16.gmra.mxu0 %v607
        %v702 = vpop.f32.mrf.mxu0
        %v703 = vadd.f32 %v611, %v702
        %v704 = vpop.f32.mrf.mxu0
        %v705 = vpop.f32.mrf.mxu0
        %v706 = vadd.f32 %v611, %v705
        %v707 = vpop.f32.mrf.mxu0
        %708 = vdwg.mxu0
        %v709 = vtanh.pop %v695
        %v710 = vtanh.pop %v698
        %v711 = vtanh.pop %v703
        %v712 = vtanh.pop %v706
        %v713 = vpack.c.bf16 %v710, %v709
        %v714 = vpack.c.bf16 %v712, %v711
        %v715 = vlaneseq
        %v716 = vshrl.u32 %v715, 7
        %v717 = vsub.s32 2, %v716
        %v718 = vrot.slane %v536, %v717
        %v735 = vunpack.c.l.b16 %v519
        %v736 = vunpack.c.l.b16 %v520
        %v737 = vunpack.c.l.b16 %v521
        %v738 = vunpack.c.l.b16 %v522
        %v739 = vunpack.c.l.b16 %v523
        %v740 = vunpack.c.l.b16 %v524
        %v741 = vunpack.c.l.b16 %v525
        %v742 = vunpack.c.l.b16 %v526
        %v743 = vunpack.c.l.b16 %v527
        %v744 = vunpack.c.l.b16 %v528
        %v745 = vunpack.c.l.b16 %v529
        %v746 = vunpack.c.l.b16 %v530
        %v747 = vunpack.c.l.b16 %v531
        %v748 = vunpack.c.l.b16 %v532
        %v749 = vunpack.c.l.b16 %v533
        %v750 = vunpack.c.l.b16 %v534
        %v751 = vpack.c.b16 %v736, %v735
        %v752 = vpack.c.b16 %v738, %v737
        %v753 = vpack.c.b16 %v740, %v739
        %v754 = vpack.c.b16 %v742, %v741
        %v755 = vpack.c.b16 %v744, %v743
        %v756 = vpack.c.b16 %v746, %v745
        %v757 = vpack.c.b16 %v748, %v747
        %v758 = vpack.c.b16 %v750, %v749
        %767 = vmatprep.subr.bf16.mxu0 0
        %768 = vmatpush1.bf16.msra.mxu0 %v758
        %769 = vmatprep.subr.bf16.mxu0 0
        %770 = vmatpush1.bf16.msra.mxu0 %v757
        %771 = vmatprep.subr.bf16.mxu0 0
        %772 = vmatpush1.bf16.msra.mxu0 %v756
        %773 = vmatprep.subr.bf16.mxu0 0
        %774 = vmatpush1.bf16.msra.mxu0 %v755
        %775 = vmatprep.subr.bf16.mxu0 0
        %776 = vmatpush1.bf16.msra.mxu0 %v754
        %777 = vmatprep.subr.bf16.mxu0 0
        %778 = vmatpush1.bf16.msra.mxu0 %v753
        %779 = vmatprep.subr.bf16.mxu0 0
        %780 = vmatpush1.bf16.msra.mxu0 %v752
        %781 = vmatprep.subr.bf16.mxu0 0
        %782 = vmatpush1.bf16.msra.mxu0 %v751
        %783 = vmatprep.subr.bf16.mxu0 0
        %784 = vmatpush2.bf16.msra.mxu0 0
        %785 = vmatprep.subr.bf16.mxu0 0
        %786 = vmatpush2.bf16.msra.mxu0 0
        %787 = vmatprep.subr.bf16.mxu0 0
        %788 = vmatpush2.bf16.msra.mxu0 0
        %789 = vmatprep.subr.bf16.mxu0 0
        %790 = vmatpush2.bf16.msra.mxu0 0
        %791 = vmatprep.subr.bf16.mxu0 0
        %792 = vmatpush2.bf16.msra.mxu0 0
        %793 = vmatprep.subr.bf16.mxu0 0
        %794 = vmatpush2.bf16.msra.mxu0 0
        %795 = vmatprep.subr.bf16.mxu0 0
        %796 = vmatpush2.bf16.msra.mxu0 0
        %797 = vmatprep.subr.bf16.mxu0 0
        %798 = vmatpush2.bf16.msra.mxu0 0
        %799 = vmatprep.mubr.bf16.mxu0 0
        %800 = vmatmul.mubr.bf16.gmra.mxu0 %v713
        %v801 = vpop.f32.mrf.mxu0
        %v802 = vadd.f32 %v718, %v801
        %v803 = vpop.f32.mrf.mxu0
        %v804 = vpop.f32.mrf.mxu0
        %v805 = vadd.f32 %v718, %v804
        %v806 = vpop.f32.mrf.mxu0
        %807 = vmatprep.mubr.bf16.mxu0 0
        %808 = vmatmul.mubr.bf16.gmra.mxu0 %v714
        %v809 = vpop.f32.mrf.mxu0
        %v810 = vadd.f32 %v718, %v809
        %v811 = vpop.f32.mrf.mxu0
        %v812 = vpop.f32.mrf.mxu0
        %v813 = vadd.f32 %v718, %v812
        %v814 = vpop.f32.mrf.mxu0
        %815 = vdwg.mxu0
        %v816 = vadd.f32 %v485, %v802
        %v817 = vadd.f32 %v488, %v805
        %v818 = vadd.f32 %v493, %v810
        %v819 = vadd.f32 %v496, %v813
        %820 = vst [vmem:[%s152] sm:$0xff] %v816
        %821 = vst [vmem:[%s152 + $0x8] sm:$0xff] %v817
        %822 = vst [vmem:[%s152 + $0x10] sm:$0xff] %v818
        %823 = vst [vmem:[%s152 + $0x18] sm:$0xff] %v819
        %s824 = sand.u32 %s72, 1
        %s825 = scalar_lea.sflag [#allocation4], %s824
        %s826 = sand.u32 %s72, 1
        %s827 = smul.addr %s826, 32
        %s828 = scalar_lea.vmem [#allocation5], %s827
        // Predicated region
        $region33: #{tpu_custom_call.1} parent=27 // pred_check
          %p829 = pneg %p82
        $region34: #{tpu_custom_call.1} parent=27 // pred_check_branch
          %831 = sbr.rel (%p829) target = $region36
        $region35: #{tpu_custom_call.1} parent=27 // pred_region
          %s832 = smul.u32 4, %s17
          %s834 = ssub.s32 512, 512
          %835 = vsyncadd %s825, %s834
          %s836 = smul.addr %s832, 128
          %s837 = scalar_lea.hbm %s2, %s836
          %s838 = sshll.u32 %s828, 4
          %s839 = int_to_ptr.vmem [resolvable:$true] %s838
          %844 = dma.vmem_to_hbm [thread:$0]  %s839, 512, %s837, %s825, 128, 128, 8
        $region36: #{tpu_custom_call.1} parent=27 // pred_fallthru
          _
      $region28: #{tpu_custom_call.1} parent=5 // pred_fallthru
        _
      %p845 = scmp.le.s32.totalorder 2, %s12
      // Predicated region
      $region37: #{tpu_custom_call.1} parent=5 // pred_check
        %p846 = pneg %p845
      $region38: #{tpu_custom_call.1} parent=5 // pred_check_branch
        %848 = sbr.rel (%p846) target = $region40
      $region39: #{tpu_custom_call.1} parent=5 // pred_region
        %s849 = ssub.s32 %s12, 2
        // Predicated region
        $region41: #{tpu_custom_call.1} parent=39 // pred_check
          %p850 = pneg %p88
        $region42: #{tpu_custom_call.1} parent=39 // pred_check_branch
          %852 = sbr.rel (%p850) target = $region44
        $region43: #{tpu_custom_call.1} parent=39 // pred_region
          %s853 = sand.u32 %s73, 1
          %s854 = scalar_lea.sflag [#allocation4], %s853
          %s855 = sand.u32 %s73, 1
          %s856 = smul.addr %s855, 32
          %s857 = scalar_lea.vmem [#allocation5], %s856
          %858 = dma.done %s854, 512
        $region44: #{tpu_custom_call.1} parent=39 // pred_fallthru
          _
      $region40: #{tpu_custom_call.1} parent=5 // pred_fallthru
        _
    $region6: #{tpu_custom_call.1} parent=1 // loop_footer
      %s16 = sadd.s32 1, %s12
    $region7: #{tpu_custom_call.1} parent=1 // loop_footer_branch
      %11 = sbr.rel target = $region3
    $region8: #{tpu_custom_call.1} parent=1 // loop_exit
      _
    %859 = vsyncpa [#allocation3], 1
    %s860 = scalar_lea.sflag [#allocation3], 1
    %861 = vsyncpa %s860, 1
    %862 = vsyncpa [#allocation4], 1
    %s863 = scalar_lea.sflag [#allocation4], 1
    %864 = vsyncpa %s863, 1

</llo_original>
